<compile_context>
chip_gen: v5e
topology: v5e:2x2
jax: 0.10.0
libtpu: 0.0.40
codegen_flags: <defaults>
</compile_context>

<pallas_src>
import math

import jax
import jax.numpy as jnp
from jax.experimental import pallas as pl
from jax.experimental.pallas import tpu as pltpu


# ----------------------------------------------------------------------------
# Helpers
# ----------------------------------------------------------------------------

_VMEM_TILE_BUDGET = 40 * 1024 * 1024   # double-buffered tiles must fit v7x (64 MiB phys)
_VMEM_LIMIT_BYTES = 48 * 1024 * 1024   # scoped VMEM limit handed to Mosaic


def _round_up(x, m):
    return ((x + m - 1) // m) * m


def _sublane(dtype):
    # native sublane packing: f32 -> 8 rows, bf16 -> 16, int8/fp8 -> 32
    return {4: 8, 2: 16, 1: 32}.get(jnp.dtype(dtype).itemsize, 8)


def select_tiles(batch, in_x, out_x, dtype, *, tm=512, tn=512, tk=2048):
    """Pick (tm, tn, tk) tiles: large, MXU-aligned, VMEM-budget constrained."""
    itemsize = jnp.dtype(dtype).itemsize
    sub = _sublane(dtype)
    # 256-aligned N/K tiles feed the v6e/v7x 2x256x256 MXU; 128 for small dims.
    lane_n = 256 if out_x > 128 else 128
    lane_k = 256 if in_x > 128 else 128

    tm = min(tm, _round_up(batch, sub))
    tn = min(tn, _round_up(out_x, lane_n))
    tk = min(tk, _round_up(in_x, lane_k))

    # Megacore (v7x has 2 TensorCores): if M collapses to one tile, try to
    # keep >= 2 tiles along N so both cores get work.
    if _round_up(batch, tm) // tm == 1:
        n_pad = _round_up(out_x, lane_n)
        if n_pad // tn < 2 and n_pad >= 2 * lane_n:
            tn = _round_up((n_pad + 1) // 2, lane_n)

    def footprint(tm_, tn_, tk_):
        # double-buffered x / w / bias / out tiles + f32 accumulator
        return (2 * (tm_ * tk_ + tk_ * tn_ + tn_ + tm_ * tn_)) * itemsize + tm_ * tn_ * 4

    while footprint(tm, tn, tk) > _VMEM_TILE_BUDGET and tk > lane_k:
        tk = max(lane_k, _round_up(tk // 2, lane_k))
    while footprint(tm, tn, tk) > _VMEM_TILE_BUDGET and tn > lane_n:
        tn = max(lane_n, _round_up(tn // 2, lane_n))
    while footprint(tm, tn, tk) > _VMEM_TILE_BUDGET and tm > sub:
        tm = max(sub, _round_up(tm // 2, sub))

    return tm, tn, tk


def prepare_linear_params(weight, bias, *, tn, tk):
    """One-time (out of the hot path) weight prep.

    weight: (out_x, in_x) torch layout -> transposed to lane-dense (in_x, out_x)
    and zero-padded to (K, N) tile multiples; bias padded to (1, N).
    """
    out_x, in_x = weight.shape
    K = _round_up(in_x, tk)
    N = _round_up(out_x, tn)

    w_t = jnp.transpose(weight)                      # (in_x, out_x)
    if (K, N) != (in_x, out_x):
        w_t = jnp.pad(w_t, ((0, K - in_x), (0, N - out_x)))
    b = bias
    if N != out_x:
        b = jnp.pad(b, (0, N - out_x))
    return w_t, b.reshape(1, N)


# ----------------------------------------------------------------------------
# Kernel
# ----------------------------------------------------------------------------

def _linear_sigmoid_kernel(x_ref, w_ref, b_ref, o_ref, acc_ref):
    """One (tm, tn) output tile; K is the innermost ('arbitrary') axis."""
    k = pl.program_id(2)

    @pl.when(k == 0)
    def _init():
        acc_ref[...] = jnp.zeros_like(acc_ref)

    # MXU matmul with f32 accumulation. w_ref is already (tk, tn) lane-dense
    # (transpose happened once in prepare_linear_params) — no XLU transpose.
    acc_ref[...] += jnp.dot(
        x_ref[...], w_ref[...], preferred_element_type=jnp.float32
    )

    @pl.when(k == pl.num_programs(2) - 1)
    def _finish():
        z = acc_ref[...] + b_ref[...].astype(jnp.float32)   # (tm,tn) + (1,tn)
        # Exact sigmoid in f32: exp on the EUP + exact reciprocal.
        # (approx=True was the source of the previous >1e-3 error.)
        s = pl.reciprocal(1.0 + jnp.exp(-z), approx=False)
        o_ref[...] = s.astype(o_ref.dtype)


# ----------------------------------------------------------------------------
# Wrappers
# ----------------------------------------------------------------------------

def linear_sigmoid_prepared(x, w_p, b_p, out_x, *, tm, tn, tk,
                            vmem_limit_bytes=_VMEM_LIMIT_BYTES):
    """sigmoid(x @ W^T + b) using a pre-transposed / pre-padded weight."""
    batch, in_x = x.shape
    K, N = w_p.shape
    assert K % tk == 0 and N % tn == 0

    M = _round_up(batch, tm)
    if M == batch and K == in_x:
        x_p = x
    else:
        x_p = jnp.pad(x, ((0, M - batch), (0, K - in_x)))

    grid = (M // tm, N // tn, K // tk)

    itemsize = jnp.dtype(x.dtype).itemsize
    cost = pl.CostEstimate(
        flops=2 * M * K * N,
        transcendentals=2 * M * N,                       # exp + reciprocal
        bytes_accessed=(
            M * K * itemsize * grid[1]                   # x re-read per N tile
            + K * N * itemsize * grid[0]                 # W re-read per M tile
            + N * itemsize * grid[0]                     # bias
            + M * N * itemsize                           # output written once
        ),
    )

    out_p = pl.pallas_call(
        _linear_sigmoid_kernel,
        out_shape=jax.ShapeDtypeStruct((M, N), x.dtype),
        grid_spec=pltpu.PrefetchScalarGridSpec(
            num_scalar_prefetch=0,
            grid=grid,
            in_specs=[
                # activations: new (tm, tk) tile per (i, k)
                pl.BlockSpec((tm, tk), lambda i, j, k: (i, k)),
                # weight: constant in i -> reused across batch tiles
                pl.BlockSpec((tk, tn), lambda i, j, k: (k, j)),
                # bias: one (1, tn) strip per output-column tile
                pl.BlockSpec((1, tn), lambda i, j, k: (0, j)),
            ],
            out_specs=pl.BlockSpec((tm, tn), lambda i, j, k: (i, j)),
            scratch_shapes=[pltpu.VMEM((tm, tn), jnp.float32)],
        ),
        compiler_params=pltpu.CompilerParams(
            dimension_semantics=("parallel", "parallel", "arbitrary"),
            vmem_limit_bytes=vmem_limit_bytes,
        ),
        cost_estimate=cost,
    )(x_p, w_p, b_p)

    if M != batch or N != out_x:
        out_p = out_p[:batch, :out_x]
    return out_p


def linear_layer(x, weight, bias, *, tm=None, tn=None, tk=None):
    """Convenience one-shot path: sigmoid(x @ weight.T + bias).

    x: (batch, in_x); weight: (out_x, in_x) (PyTorch layout); bias: (out_x,).
    For repeated calls, use select_tiles + prepare_linear_params once and call
    linear_sigmoid_prepared directly.
    """
    batch, in_x = x.shape
    out_x, in_x_w = weight.shape
    assert in_x == in_x_w

    atm, atn, atk = select_tiles(batch, in_x, out_x, x.dtype)
    tm = tm if tm is not None else atm
    tn = tn if tn is not None else atn
    tk = tk if tk is not None else atk

    w_p, b_p = prepare_linear_params(weight, bias, tn=tn, tk=tk)
    return linear_sigmoid_prepared(x, w_p, b_p, out_x, tm=tm, tn=tn, tk=tk)


def init_linear_params(key, in_x, out_x, dtype=jnp.float32):
    """Deterministic init mimicking torch.nn.Linear default (uniform +-1/sqrt(in_x))."""
    kw, kb = jax.random.split(key)
    bound = 1.0 / math.sqrt(in_x)
    weight = jax.random.uniform(kw, (out_x, in_x), dtype, minval=-bound, maxval=bound)
    bias = jax.random.uniform(kb, (out_x,), dtype, minval=-bound, maxval=bound)
    return weight, bias


# ----------------------------------------------------------------------------
# Self-test
# ----------------------------------------------------------------------------

if __name__ == "__main__":
    key = jax.random.PRNGKey(0)

    # Case 1: tiny shape matching the module usage (batch=8, in_x=32, out_x=16).
    k_x, k_p, k_x2, k_p2 = jax.random.split(key, 4)
    batch, in_x, out_x = 8, 32, 16
    x = jax.random.normal(k_x, (batch, in_x), dtype=jnp.float32)
    weight, bias = init_linear_params(k_p, in_x, out_x)

    out = jax.block_until_ready(linear_layer(x, weight, bias))
    ref = jax.nn.sigmoid(x @ weight.T + bias[None, :])
    assert out.shape == (batch, out_x)
    assert jnp.allclose(out, ref, atol=1e-5, rtol=1e-5), (
        float(jnp.max(jnp.abs(out - ref)))
    )

    # Case 2: non-aligned dims + forced small tk so the K accumulation loop
    # (pl.when init / epilogue across multiple K steps) is exercised.
    batch2, in_x2, out_x2 = 96, 300, 200
    x2 = jax.random.normal(k_x2, (batch2, in_x2), dtype=jnp.float32)
    weight2, bias2 = init_linear_params(k_p2, in_x2, out_x2)

    out2 = jax.block_until_ready(
        linear_layer(x2, weight2, bias2, tm=96, tn=128, tk=128)
    )
    ref2 = jax.nn.sigmoid(x2 @ weight2.T + bias2[None, :])
    assert out2.shape == (batch2, out_x2)
    assert jnp.allclose(out2, ref2, atol=1e-5, rtol=1e-5), (
        float(jnp.max(jnp.abs(out2 - ref2)))
    )

    print("KERNEL_OK")
</pallas_src>

<mosaic_0001>
module attributes {stable_mosaic.version = 11 : i64} {
  func.func @_linear_sigmoid_kernel(%arg0: i32, %arg1: i32, %arg2: i32, %arg3: memref<8x128xf32, #tpu.memory_space<vmem>>, %arg4: memref<128x128xf32, #tpu.memory_space<vmem>>, %arg5: memref<1x128xf32, #tpu.memory_space<vmem>>, %arg6: memref<8x128xf32, #tpu.memory_space<vmem>>, %arg7: memref<8x128xf32, #tpu.memory_space<vmem>>) attributes {dimension_semantics = [#tpu.dimension_semantics<parallel>, #tpu.dimension_semantics<parallel>, #tpu.dimension_semantics<arbitrary>], iteration_bounds = array<i64: 1, 1, 1>, scalar_prefetch = 0 : i64, scratch_operands = 1 : i64, tpu.core_type = #tpu.core_type<tc>, window_params = [{transform_indices = @transform_0, window_bounds = array<i64: 8, 128>}, {transform_indices = @transform_1, window_bounds = array<i64: 128, 128>}, {transform_indices = @transform_2, window_bounds = array<i64: 1, 128>}, {transform_indices = @transform_3, window_bounds = array<i64: 8, 128>}]} {
    %c0_i32 = arith.constant 0 : i32
    %0 = arith.cmpi eq, %arg2, %c0_i32 : i32
    %1 = arith.extui %0 : i1 to i32
    %c0_i32_0 = arith.constant 0 : i32
    %2 = arith.cmpi ne, %1, %c0_i32_0 : i32
    scf.if %2 {
      %cst_10 = arith.constant 0.000000e+00 : f32
      %12 = vector.broadcast %cst_10 : f32 to vector<8x128xf32>
      %c0_11 = arith.constant 0 : index
      %c0_12 = arith.constant 0 : index
      %13 = vector.load %arg7[%c0_11, %c0_12] : memref<8x128xf32, #tpu.memory_space<vmem>>, vector<8x128xf32>
      tpu.vector_store %arg7[%c0_11, %c0_12], %12 {strides = array<i32>} : memref<8x128xf32, #tpu.memory_space<vmem>>, vector<8x128xf32>,
    } else {
    }
    %c0 = arith.constant 0 : index
    %c0_1 = arith.constant 0 : index
    %3 = vector.load %arg7[%c0, %c0_1] : memref<8x128xf32, #tpu.memory_space<vmem>>, vector<8x128xf32>
    %c0_2 = arith.constant 0 : index
    %c0_3 = arith.constant 0 : index
    %4 = vector.load %arg3[%c0_2, %c0_3] : memref<8x128xf32, #tpu.memory_space<vmem>>, vector<8x128xf32>
    %c0_4 = arith.constant 0 : index
    %c0_5 = arith.constant 0 : index
    %5 = vector.load %arg4[%c0_4, %c0_5] : memref<128x128xf32, #tpu.memory_space<vmem>>, vector<128x128xf32>
    %cst = arith.constant dense<0.000000e+00> : vector<8x128xf32>
    %6 = tpu.matmul %4, %5, %cst {dimension_numbers = #tpu.dot_dimension_numbers<[1], [0], [0], [1], [0, 0, 1, 1], [], []>} : vector<8x128xf32>, vector<128x128xf32>, vector<8x128xf32> -> vector<8x128xf32>
    %7 = arith.addf %3, %6 : vector<8x128xf32>
    %c0_6 = arith.constant 0 : index
    %c0_7 = arith.constant 0 : index
    %8 = vector.load %arg7[%c0_6, %c0_7] : memref<8x128xf32, #tpu.memory_space<vmem>>, vector<8x128xf32>
    tpu.vector_store %arg7[%c0_6, %c0_7], %7 {strides = array<i32>} : memref<8x128xf32, #tpu.memory_space<vmem>>, vector<8x128xf32>,
    %c0_i32_8 = arith.constant 0 : i32
    %9 = arith.cmpi eq, %arg2, %c0_i32_8 : i32
    %10 = arith.extui %9 : i1 to i32
    %c0_i32_9 = arith.constant 0 : i32
    %11 = arith.cmpi ne, %10, %c0_i32_9 : i32
    scf.if %11 {
      %c0_10 = arith.constant 0 : index
      %c0_11 = arith.constant 0 : index
      %12 = vector.load %arg7[%c0_10, %c0_11] : memref<8x128xf32, #tpu.memory_space<vmem>>, vector<8x128xf32>
      %c0_12 = arith.constant 0 : index
      %c0_13 = arith.constant 0 : index
      %13 = vector.load %arg5[%c0_12, %c0_13] : memref<1x128xf32, #tpu.memory_space<vmem>>, vector<1x128xf32>
      %14 = vector.broadcast %13 : vector<1x128xf32> to vector<8x128xf32>
      %15 = arith.addf %12, %14 : vector<8x128xf32>
      %cst_14 = arith.constant 0.000000e+00 : f32
      %16 = vector.broadcast %cst_14 : f32 to vector<8x128xf32>
      %17 = arith.subf %16, %15 : vector<8x128xf32>
      %18 = math.exp %17 : vector<8x128xf32>
      %cst_15 = arith.constant 1.000000e+00 : f32
      %19 = vector.broadcast %cst_15 : f32 to vector<8x128xf32>
      %20 = arith.addf %19, %18 : vector<8x128xf32>
      %21 = tpu.reciprocal %20 : vector<8x128xf32> -> vector<8x128xf32>
      %c0_16 = arith.constant 0 : index
      %c0_17 = arith.constant 0 : index
      %22 = vector.load %arg6[%c0_16, %c0_17] : memref<8x128xf32, #tpu.memory_space<vmem>>, vector<8x128xf32>
      tpu.vector_store %arg6[%c0_16, %c0_17], %21 {strides = array<i32>} : memref<8x128xf32, #tpu.memory_space<vmem>>, vector<8x128xf32>,
    } else {
    }
    return
  }
  func.func @transform_0(%arg0: i32, %arg1: i32, %arg2: i32) -> (i32, i32) {
    %c0_i32 = arith.constant 0 : i32
    return %arg0, %arg2 : i32, i32
  }
  func.func @transform_1(%arg0: i32, %arg1: i32, %arg2: i32) -> (i32, i32) {
    %c0_i32 = arith.constant 0 : i32
    return %arg2, %arg1 : i32, i32
  }
  func.func @transform_2(%arg0: i32, %arg1: i32, %arg2: i32) -> (i32, i32) {
    %c0_i32 = arith.constant 0 : i32
    %c0_i32_0 = arith.constant 0 : i32
    return %c0_i32, %arg1 : i32, i32
  }
  func.func @transform_3(%arg0: i32, %arg1: i32, %arg2: i32) -> (i32, i32) {
    %c0_i32 = arith.constant 0 : i32
    return %arg0, %arg1 : i32, i32
  }
}

</mosaic_0001>

<llo_original>
// kernel: tpu_custom_call.1
$region0: #{tpu_custom_call.1}
  #allocation0 [shape = 'u32[]', space=smem, size = 0x4, offset = 0x4, fixed_abs, tag = 'smem constant byte address 0x4 - core index']
  #allocation1 [shape = 'u32[72,128]{1,0:T(1,128)}', space=vmem, size = 0x9000, scoped, tag = 'internal scratch']
  #allocation2 [shape = 'f32[8,128]{1,0:T(8,128)}', space=vmem, size = 0x1000, scoped, tag = 'scratch operand']
  %s0 = inlined_call_operand.hbm [shape: f32[8,128], index: 0, kind: input, shape index: {}]
  %s1 = inlined_call_operand.hbm [shape: f32[128,128], index: 1, kind: input, shape index: {}]
  %s2 = inlined_call_operand.vmem [shape: f32[1,128], index: 2, kind: input, shape index: {}]
  %s3 = inlined_call_operand.hbm [shape: f32[8,128], index: 3, kind: output, shape index: {}]
  %s4 = sld [smem:[#allocation0]]
  $region38: #{tpu_custom_call.1} parent=0
    _
  %s6 = ssub.s32 1, %s4
  %s7 = scalar_select 0, %s6, %s4
  $region1: #{tpu_custom_call.1} parent=0
    #allocation3 [shape = 'u8[4096]{0}', space=vmem, size = 0x1000, scoped, tag = 'input window, operand 0, single buffered']
    #allocation4 [shape = 's32[1]{0}', space=sflag, size = 0x4, scoped, tag = 'scoped memory for tpu_custom_call.1']
    #allocation5 [shape = 's32[1]{0}', space=sflag, size = 0x4, scoped, tag = 'scoped memory for tpu_custom_call.1']
    #allocation6 [shape = 'u8[65536]{0}', space=vmem, size = 0x10000, scoped, tag = 'input window, operand 1, single buffered']
    #allocation7 [shape = 's32[1]{0}', space=sflag, size = 0x4, scoped, tag = 'scoped memory for tpu_custom_call.1']
    #allocation8 [shape = 'u8[4096]{0}', space=vmem, size = 0x1000, scoped, tag = 'output window, operand 0, single buffered']
    %8 = vsyncpa [#allocation4], 0
    %9 = vsyncpa [#allocation7], 0
    %10 = vsyncpa [#allocation5], 0
    // Predicated region
    $region2: #{tpu_custom_call.1} parent=1 // pred_check
      _
    $region3: #{tpu_custom_call.1} parent=1 // pred_check_branch
      %12 = sbr.rel (0) target = $region5
    $region4: #{tpu_custom_call.1} parent=1 // pred_region
      %14 = vsyncadd [#allocation4], 0
      %s16 = sshll.u32 %s0, 4
      %s17 = int_to_ptr.hbm [resolvable:$true] %s16
      %s18 = sshll.u32 [#allocation3], 4
      %s19 = int_to_ptr.vmem [resolvable:$true] %s18
      %21 = dma.hbm_to_vmem [thread:$0]  %s17, 128, %s19, [#allocation4]
    $region5: #{tpu_custom_call.1} parent=1 // pred_fallthru
      _
    // Predicated region
    $region6: #{tpu_custom_call.1} parent=1 // pred_check
      _
    $region7: #{tpu_custom_call.1} parent=1 // pred_check_branch
      %23 = sbr.rel (0) target = $region9
    $region8: #{tpu_custom_call.1} parent=1 // pred_region
      %25 = vsyncadd [#allocation7], 0
      %s26 = sshll.u32 %s1, 4
      %s27 = int_to_ptr.hbm [resolvable:$true] %s26
      %s28 = sshll.u32 [#allocation6], 4
      %s29 = int_to_ptr.vmem [resolvable:$true] %s28
      %34 = dma.hbm_to_vmem [thread:$0]  %s27, 2048, %s29, [#allocation7], 128, 128, 8
    $region9: #{tpu_custom_call.1} parent=1 // pred_fallthru
      _
    // Predicated region
    $region10: #{tpu_custom_call.1} parent=1 // pred_check
      _
    $region11: #{tpu_custom_call.1} parent=1 // pred_check_branch
      %36 = sbr.rel (0) target = $region13
    $region12: #{tpu_custom_call.1} parent=1 // pred_region
      _
    $region13: #{tpu_custom_call.1} parent=1 // pred_fallthru
      _
    // Predicated region
    $region14: #{tpu_custom_call.1} parent=1 // pred_check
      _
    $region15: #{tpu_custom_call.1} parent=1 // pred_check_branch
      %38 = sbr.rel (0) target = $region17
    $region16: #{tpu_custom_call.1} parent=1 // pred_region
      %40 = dma.done [#allocation4], 128
    $region17: #{tpu_custom_call.1} parent=1 // pred_fallthru
      _
    // Predicated region
    $region18: #{tpu_custom_call.1} parent=1 // pred_check
      _
    $region19: #{tpu_custom_call.1} parent=1 // pred_check_branch
      %42 = sbr.rel (0) target = $region21
    $region20: #{tpu_custom_call.1} parent=1 // pred_region
      %44 = dma.done [#allocation7], 2048
    $region21: #{tpu_custom_call.1} parent=1 // pred_fallthru
      _
    %p45 = scmp.eq.s32.totalorder 0, 0
    // Predicated region
    $region22: #{tpu_custom_call.1} parent=1 // pred_check
      %p46 = pneg %p45
    $region23: #{tpu_custom_call.1} parent=1 // pred_check_branch
      %48 = sbr.rel (%p46) target = $region25
    $region24: #{tpu_custom_call.1} parent=1 // pred_region
      %49 = vst [vmem:[#allocation2] sm:$0xff] 0.0
    $region25: #{tpu_custom_call.1} parent=1 // pred_fallthru
      _
    %v50 = vld [vmem:[#allocation2] sm:$0xff]
    %v51 = vld [vmem:[#allocation3] sm:$0xff]
    %v52 = vld [vmem:[#allocation6] sm:$0xff]
    %v53 = vld [vmem:[#allocation6 + $0x8] sm:$0xff]
    %v54 = vld [vmem:[#allocation6 + $0x10] sm:$0xff]
    %v55 = vld [vmem:[#allocation6 + $0x18] sm:$0xff]
    %v56 = vld [vmem:[#allocation6 + $0x20] sm:$0xff]
    %v57 = vld [vmem:[#allocation6 + $0x28] sm:$0xff]
    %v58 = vld [vmem:[#allocation6 + $0x30] sm:$0xff]
    %v59 = vld [vmem:[#allocation6 + $0x38] sm:$0xff]
    %v60 = vld [vmem:[#allocation6 + $0x40] sm:$0xff]
    %v61 = vld [vmem:[#allocation6 + $0x48] sm:$0xff]
    %v62 = vld [vmem:[#allocation6 + $0x50] sm:$0xff]
    %v63 = vld [vmem:[#allocation6 + $0x58] sm:$0xff]
    %v64 = vld [vmem:[#allocation6 + $0x60] sm:$0xff]
    %v65 = vld [vmem:[#allocation6 + $0x68] sm:$0xff]
    %v66 = vld [vmem:[#allocation6 + $0x70] sm:$0xff]
    %v67 = vld [vmem:[#allocation6 + $0x78] sm:$0xff]
    %68 = vmatpush.msra.mxu0 %v67
    %69 = vmatpush.msra.mxu0 %v66
    %70 = vmatpush.msra.mxu0 %v65
    %71 = vmatpush.msra.mxu0 %v64
    %72 = vmatpush.msra.mxu0 %v63
    %73 = vmatpush.msra.mxu0 %v62
    %74 = vmatpush.msra.mxu0 %v61
    %75 = vmatpush.msra.mxu0 %v60
    %76 = vmatpush.msra.mxu0 %v59
    %77 = vmatpush.msra.mxu0 %v58
    %78 = vmatpush.msra.mxu0 %v57
    %79 = vmatpush.msra.mxu0 %v56
    %80 = vmatpush.msra.mxu0 %v55
    %81 = vmatpush.msra.mxu0 %v54
    %82 = vmatpush.msra.mxu0 %v53
    %83 = vmatpush.msra.mxu0 %v52
    %84 = vmatmul.f32.gmra.mxu0 %v51
    %v85 = vpop.f32.mrf.mxu0
    %v86 = vadd.f32 0.0, %v85
    %87 = vdwg.mxu0
    %v88 = vadd.f32 %v50, %v86
    %89 = vst [vmem:[#allocation2] sm:$0xff] %v88
    // Predicated region
    $region26: #{tpu_custom_call.1} parent=1 // pred_check
      %p90 = pneg %p45
    $region27: #{tpu_custom_call.1} parent=1 // pred_check_branch
      %92 = sbr.rel (%p90) target = $region29
    $region28: #{tpu_custom_call.1} parent=1 // pred_region
      %v93 = vld [vmem:[#allocation2] sm:$0xff]
      %v94 = vld [vmem:[%s2] sm:$0x1]
      %v96 = vperm.slane %v94, 0
      %v98 = vadd.f32 %v93, %v96
      %v99 = vsub.f32 0.0, %v98
      %v100 = vmul.f32 %v99, 1.442695
      %v101 = vpow.pop %v100
      %v102 = vadd.f32 %v101, 1.0
      %v103 = vrcp.pop %v102
      %v104 = vmul.f32 %v102, %v103
      %v105 = vsub.f32 1.0, %v104
      %v106 = vmul.f32 %v103, %v105
      %v107 = vadd.f32 %v103, %v106
      %vm108 = vweird.f32 %v102
      %vm109 = vweird.f32 %v103
      %vm110 = vmor %vm108, %vm109
      %v111 = vsel %vm110, %v103, %v107
      %v112 = vand.u32 2147483647, %v102
      %vm113 = vcmp.eq.f32.partialorder %v112, 8.507059e+37
      %v114 = vand.u32 %v102, 2147483648
      %v115 = vor.u32 1.1754944e-38, %v114
      %v116 = vsel %vm113, %v115, %v111
      %117 = vst [vmem:[#allocation8] sm:$0xff] %v116
    $region29: #{tpu_custom_call.1} parent=1 // pred_fallthru
      _
    // Predicated region
    $region30: #{tpu_custom_call.1} parent=1 // pred_check
      _
    $region31: #{tpu_custom_call.1} parent=1 // pred_check_branch
      %119 = sbr.rel (0) target = $region33
    $region32: #{tpu_custom_call.1} parent=1 // pred_region
      %121 = vsyncadd [#allocation5], 0
      %s123 = sshll.u32 [#allocation8], 4
      %s124 = int_to_ptr.vmem [resolvable:$true] %s123
      %s125 = sshll.u32 %s3, 4
      %s126 = int_to_ptr.hbm [resolvable:$true] %s125
      %128 = dma.vmem_to_hbm [thread:$0]  %s124, 128, %s126, [#allocation5]
    $region33: #{tpu_custom_call.1} parent=1 // pred_fallthru
      _
    // Predicated region
    $region34: #{tpu_custom_call.1} parent=1 // pred_check
      _
    $region35: #{tpu_custom_call.1} parent=1 // pred_check_branch
      %130 = sbr.rel (0) target = $region37
    $region36: #{tpu_custom_call.1} parent=1 // pred_region
      %132 = dma.done [#allocation5], 128
    $region37: #{tpu_custom_call.1} parent=1 // pred_fallthru
      _
    %133 = vsyncpa [#allocation4], 1
    %134 = vsyncpa [#allocation7], 1
    %135 = vsyncpa [#allocation5], 1

</llo_original>
